<compile_context>
chip_gen: v6e
topology: v6e:2x2x1
jax: 0.10.0
libtpu: 0.0.40
codegen_flags: <defaults>
</compile_context>

<pallas_src>
from functools import partial

import jax
import jax.numpy as jnp
from jax.experimental import pallas as pl
from jax.experimental.pallas import tpu as pltpu

_LANES = 128


def _mape_kernel(x_ref, y_ref, o_ref, *, valid_rows, need_row_mask):
    x = x_ref[...].astype(jnp.float32)
    y = y_ref[...].astype(jnp.float32)

    ay = jnp.abs(y)
    mask = ay <= jnp.float32(0.001)

    if need_row_mask:
        # Last grid block may extend past the real rows: mask garbage rows.
        tile_rows = x_ref.shape[0]
        row = (jax.lax.broadcasted_iota(jnp.int32, x.shape, 0)
               + pl.program_id(0) * tile_rows)
        mask = mask | (row >= valid_rows)

    # |100*(x-y)/y| == 100*|x-y|/|y|; the 100 and 1/n factors are hoisted to
    # the wrapper, and |y| (needed for the mask anyway) is reused as the
    # denominator, so the inner loop is just abs/sub/div + two selects.
    denom = jnp.where(mask, jnp.float32(1.0), ay)
    contrib = jnp.where(mask, jnp.float32(0.0), jnp.abs(x - y) / denom)

    # (tile_rows,128) -> (tile_rows//8, 8, 128); reducing the leading axis is
    # plain elementwise vreg adds (VPU) -- no per-step cross-lane XLU reduce
    # and no serial scalar accumulator.
    o_ref[0] = contrib.reshape(-1, 8, _LANES).sum(axis=0)


def mape_loss(x, y, *, tile_rows=1024):
    """Pallas implementation of PyTorch mape_loss.forward(x, y)."""
    assert x.shape == y.shape, "x and y must have the same shape"
    n_total = x.size

    # Sublane packing multiple for the native dtype (8 for f32, 16 for bf16,
    # 32 for int8/fp8): inputs stream in native dtype, cast to f32 in-kernel.
    def _sub(dt):
        return max(8, 32 // jnp.dtype(dt).itemsize)

    sub = max(_sub(x.dtype), _sub(y.dtype))
    chunk = sub * _LANES

    xf = jnp.ravel(x)
    yf = jnp.ravel(y)
    pad = (-n_total) % chunk
    if pad:
        # Padded entries have y == 0 -> |y| <= 1e-3 -> contribute exactly 0.
        # Only triggers when the size is not already a multiple of sub*128.
        xf = jnp.pad(xf, (0, pad))
        yf = jnp.pad(yf, (0, pad))
    rows = (n_total + pad) // _LANES

    tr = max(sub, min(int(tile_rows), rows))
    tr -= tr % sub                      # keep block sublane-aligned
    num_blocks = pl.cdiv(rows, tr)
    need_row_mask = (rows % tr) != 0    # partial last block -> mask in kernel

    x2 = xf.reshape(rows, _LANES)
    y2 = yf.reshape(rows, _LANES)

    partials = pl.pallas_call(
        partial(_mape_kernel, valid_rows=rows, need_row_mask=need_row_mask),
        out_shape=jax.ShapeDtypeStruct((num_blocks, 8, _LANES), jnp.float32),
        grid=(num_blocks,),
        in_specs=[
            pl.BlockSpec((tr, _LANES), lambda i: (i, 0)),
            pl.BlockSpec((tr, _LANES), lambda i: (i, 0)),
        ],
        out_specs=pl.BlockSpec((1, 8, _LANES), lambda i: (i, 0, 0)),
        compiler_params=pltpu.CompilerParams(
            dimension_semantics=("parallel",),
        ),
    )(x2, y2)

    # Tiny finish in JAX: tree-reduce the partials, apply 100/n once.
    return jnp.sum(partials) * jnp.float32(100.0 / n_total)


def _mape_reference(x, y):
    x = x.astype(jnp.float32)
    y = y.astype(jnp.float32)
    mask = jnp.abs(y) <= 0.001
    safe_y = jnp.where(mask, 1.0, y)
    result = 100.0 * (x - y) / safe_y
    result = jnp.where(mask, 0.0, result)
    return jnp.mean(jnp.abs(result))


if __name__ == "__main__":
    key = jax.random.PRNGKey(0)
    kx, ky, kx2, ky2 = jax.random.split(key, 4)

    # Case 1: typical small NCHW tensor (2048 elems -> single 16x128 block).
    shape = (2, 4, 16, 16)
    x = jax.random.normal(kx, shape, dtype=jnp.float32)
    y = jax.random.normal(ky, shape, dtype=jnp.float32)
    # Force a few "near-zero target" entries so the mask path is exercised.
    y = y.at[0, 0, 0, :4].set(jnp.array([0.0, 0.0005, -0.0003, 0.0009]))

    out = jax.block_until_ready(mape_loss(x, y))
    ref = jax.block_until_ready(_mape_reference(x, y))
    assert jnp.allclose(out, ref, rtol=2e-5, atol=1e-5), (out, ref)

    # Case 2: exercise the partial-last-block row-mask path
    # (24 rows of 128; tile_rows=16 -> grid of 2 with a half-valid last block).
    shape2 = (3, 1, 8, 128)
    x2 = jax.random.normal(kx2, shape2, dtype=jnp.float32)
    y2 = jax.random.normal(ky2, shape2, dtype=jnp.float32)
    y2 = y2.at[1, 0, 3, :8].set(0.0)

    out2 = jax.block_until_ready(mape_loss(x2, y2, tile_rows=16))
    ref2 = jax.block_until_ready(_mape_reference(x2, y2))
    assert jnp.allclose(out2, ref2, rtol=2e-5, atol=1e-5), (out2, ref2)

    print("KERNEL_OK")
</pallas_src>

<mosaic_0001>
module attributes {stable_mosaic.version = 11 : i64} {
  func.func @_mape_kernel(%arg0: i32, %arg1: memref<16x128xf32, #tpu.memory_space<vmem>>, %arg2: memref<16x128xf32, #tpu.memory_space<vmem>>, %arg3: memref<1x8x128xf32, #tpu.memory_space<vmem>>) attributes {dimension_semantics = [#tpu.dimension_semantics<parallel>], iteration_bounds = array<i64: 1>, scalar_prefetch = 0 : i64, scratch_operands = 0 : i64, tpu.core_type = #tpu.core_type<tc>, window_params = [{transform_indices = @transform_0, window_bounds = array<i64: 16, 128>}, {transform_indices = @transform_1, window_bounds = array<i64: 16, 128>}, {transform_indices = @transform_2, window_bounds = array<i64: 1, 8, 128>}]} {
    %c0 = arith.constant 0 : index
    %c0_0 = arith.constant 0 : index
    %0 = vector.load %arg1[%c0, %c0_0] : memref<16x128xf32, #tpu.memory_space<vmem>>, vector<16x128xf32>
    %c0_1 = arith.constant 0 : index
    %c0_2 = arith.constant 0 : index
    %1 = vector.load %arg2[%c0_1, %c0_2] : memref<16x128xf32, #tpu.memory_space<vmem>>, vector<16x128xf32>
    %2 = math.absf %1 : vector<16x128xf32>
    %cst = arith.constant 1.000000e-03 : f32
    %3 = vector.broadcast %cst : f32 to vector<16x128xf32>
    %4 = arith.cmpf ole, %2, %3 : vector<16x128xf32>
    %cst_3 = arith.constant 1.000000e+00 : f32
    %5 = vector.broadcast %cst_3 : f32 to vector<16x128xf32>
    %6 = arith.select %4, %5, %2 : vector<16x128xi1>, vector<16x128xf32>
    %7 = arith.subf %0, %1 : vector<16x128xf32>
    %8 = math.absf %7 : vector<16x128xf32>
    %9 = arith.divf %8, %6 : vector<16x128xf32>
    %cst_4 = arith.constant 0.000000e+00 : f32
    %10 = vector.broadcast %cst_4 : f32 to vector<16x128xf32>
    %11 = arith.select %4, %10, %9 : vector<16x128xi1>, vector<16x128xf32>
    %12 = vector.shape_cast %11 : vector<16x128xf32> to vector<2x8x128xf32>
    %cst_5 = arith.constant dense<0.000000e+00> : vector<8x128xf32>
    %13 = vector.multi_reduction <add>, %12, %cst_5 [0] : vector<2x8x128xf32> to vector<8x128xf32>
    %c0_6 = arith.constant 0 : index
    %c0_7 = arith.constant 0 : index
    %c0_8 = arith.constant 0 : index
    %14 = vector.load %arg3[%c0_6, %c0_7, %c0_8] : memref<1x8x128xf32, #tpu.memory_space<vmem>>, vector<1x8x128xf32>
    %15 = vector.shape_cast %14 : vector<1x8x128xf32> to vector<8x128xf32>
    %16 = vector.shape_cast %13 : vector<8x128xf32> to vector<1x8x128xf32>
    tpu.vector_store %arg3[%c0_6, %c0_7, %c0_8], %16 {strides = array<i32>} : memref<1x8x128xf32, #tpu.memory_space<vmem>>, vector<1x8x128xf32>,
    return
  }
  func.func @transform_0(%arg0: i32) -> (i32, i32) {
    %c0_i32 = arith.constant 0 : i32
    %c0_i32_0 = arith.constant 0 : i32
    return %arg0, %c0_i32 : i32, i32
  }
  func.func @transform_1(%arg0: i32) -> (i32, i32) {
    %c0_i32 = arith.constant 0 : i32
    %c0_i32_0 = arith.constant 0 : i32
    return %arg0, %c0_i32 : i32, i32
  }
  func.func @transform_2(%arg0: i32) -> (i32, i32, i32) {
    %c0_i32 = arith.constant 0 : i32
    %c0_i32_0 = arith.constant 0 : i32
    %c0_i32_1 = arith.constant 0 : i32
    return %arg0, %c0_i32, %c0_i32_0 : i32, i32, i32
  }
}

</mosaic_0001>

<llo_original>
// kernel: tpu_custom_call.1
$region0: #{tpu_custom_call.1}
  #allocation0 [shape = 'u32[]', space=smem, size = 0x4, offset = 0x4, fixed_abs, tag = 'smem constant byte address 0x4 - core index']
  #allocation1 [shape = 'u32[144,128]{1,0:T(1,128)}', space=vmem, size = 0x12000, scoped, tag = 'internal scratch']
  %s0 = inlined_call_operand.hbm [shape: f32[16,128], index: 0, kind: input, shape index: {}]
  %s1 = inlined_call_operand.hbm [shape: f32[16,128], index: 1, kind: input, shape index: {}]
  %s2 = inlined_call_operand.hbm [shape: f32[1,8,128], index: 2, kind: output, shape index: {}]
  %s3 = sld [smem:[#allocation0]]
  $region26: #{tpu_custom_call.1} parent=0
    _
  %s5 = ssub.s32 1, %s3
  %s6 = scalar_select 0, %s5, %s3
  $region1: #{tpu_custom_call.1} parent=0
    #allocation2 [shape = 'u8[8192]{0}', space=vmem, size = 0x2000, scoped, tag = 'input window, operand 0, single buffered']
    #allocation3 [shape = 's32[1]{0}', space=sflag, size = 0x4, scoped, tag = 'scoped memory for tpu_custom_call.1']
    #allocation4 [shape = 's32[1]{0}', space=sflag, size = 0x4, scoped, tag = 'scoped memory for tpu_custom_call.1']
    #allocation5 [shape = 'u8[8192]{0}', space=vmem, size = 0x2000, scoped, tag = 'input window, operand 1, single buffered']
    #allocation6 [shape = 's32[1]{0}', space=sflag, size = 0x4, scoped, tag = 'scoped memory for tpu_custom_call.1']
    #allocation7 [shape = 'u8[4096]{0}', space=vmem, size = 0x1000, scoped, tag = 'output window, operand 0, single buffered']
    %7 = vsyncpa [#allocation3], 0
    %8 = vsyncpa [#allocation6], 0
    %9 = vsyncpa [#allocation4], 0
    // Predicated region
    $region2: #{tpu_custom_call.1} parent=1 // pred_check
      _
    $region3: #{tpu_custom_call.1} parent=1 // pred_check_branch
      %11 = sbr.rel (0) target = $region5
    $region4: #{tpu_custom_call.1} parent=1 // pred_region
      %s13 = ssub.s32 256, 256
      %14 = vsyncadd [#allocation3], %s13
      %s15 = sshll.u32 [#allocation2], 4
      %s16 = int_to_ptr.vmem [resolvable:$true] %s15
      %21 = dma.hbm_to_vmem [thread:$0]  %s0, 256, %s16, [#allocation3], 128, 128, 8
    $region5: #{tpu_custom_call.1} parent=1 // pred_fallthru
      _
    // Predicated region
    $region6: #{tpu_custom_call.1} parent=1 // pred_check
      _
    $region7: #{tpu_custom_call.1} parent=1 // pred_check_branch
      %23 = sbr.rel (0) target = $region9
    $region8: #{tpu_custom_call.1} parent=1 // pred_region
      %s25 = ssub.s32 256, 256
      %26 = vsyncadd [#allocation6], %s25
      %s27 = sshll.u32 [#allocation5], 4
      %s28 = int_to_ptr.vmem [resolvable:$true] %s27
      %33 = dma.hbm_to_vmem [thread:$0]  %s1, 256, %s28, [#allocation6], 128, 128, 8
    $region9: #{tpu_custom_call.1} parent=1 // pred_fallthru
      _
    // Predicated region
    $region10: #{tpu_custom_call.1} parent=1 // pred_check
      _
    $region11: #{tpu_custom_call.1} parent=1 // pred_check_branch
      %35 = sbr.rel (0) target = $region13
    $region12: #{tpu_custom_call.1} parent=1 // pred_region
      %36 = dma.done [#allocation3], 256
    $region13: #{tpu_custom_call.1} parent=1 // pred_fallthru
      _
    // Predicated region
    $region14: #{tpu_custom_call.1} parent=1 // pred_check
      _
    $region15: #{tpu_custom_call.1} parent=1 // pred_check_branch
      %38 = sbr.rel (0) target = $region17
    $region16: #{tpu_custom_call.1} parent=1 // pred_region
      %39 = dma.done [#allocation6], 256
    $region17: #{tpu_custom_call.1} parent=1 // pred_fallthru
      _
    %v40 = vld [vmem:[#allocation2] sm:$0xff]
    %v41 = vld [vmem:[#allocation2 + $0x8] sm:$0xff]
    %v42 = vld [vmem:[#allocation5] sm:$0xff]
    %v43 = vld [vmem:[#allocation5 + $0x8] sm:$0xff]
    %v44 = vand.u32 2147483647, %v42
    %v45 = vand.u32 2147483647, %v43
    %vm46 = vcmp.le.f32.partialorder %v44, 0.001
    %vm47 = vcmp.le.f32.partialorder %v45, 0.001
    %v48 = vsel %vm46, 1.0, %v44
    %v49 = vsel %vm47, 1.0, %v45
    %v50 = vsub.f32 %v40, %v42
    %v51 = vsub.f32 %v41, %v43
    %v52 = vand.u32 2147483647, %v50
    %v53 = vand.u32 2147483647, %v51
    %v54 = vrcp.pop %v48
    %v55 = vmul.f32 %v52, %v54
    %v56 = vrcp.pop %v49
    %v57 = vmul.f32 %v53, %v56
    %v58 = vsel %vm46, 0.0, %v55
    %v59 = vsel %vm47, 0.0, %v57
    %v60 = vadd.f32 %v58, %v59
    %61 = vst [vmem:[#allocation7] sm:$0xff] %v60
    // Predicated region
    $region18: #{tpu_custom_call.1} parent=1 // pred_check
      _
    $region19: #{tpu_custom_call.1} parent=1 // pred_check_branch
      %63 = sbr.rel (0) target = $region21
    $region20: #{tpu_custom_call.1} parent=1 // pred_region
      %s65 = ssub.s32 128, 128
      %66 = vsyncadd [#allocation4], %s65
      %s68 = sshll.u32 [#allocation7], 4
      %s69 = int_to_ptr.vmem [resolvable:$true] %s68
      %71 = dma.vmem_to_hbm [thread:$0]  %s69, 128, %s2, [#allocation4]
    $region21: #{tpu_custom_call.1} parent=1 // pred_fallthru
      _
    // Predicated region
    $region22: #{tpu_custom_call.1} parent=1 // pred_check
      _
    $region23: #{tpu_custom_call.1} parent=1 // pred_check_branch
      %73 = sbr.rel (0) target = $region25
    $region24: #{tpu_custom_call.1} parent=1 // pred_region
      %74 = dma.done [#allocation4], 128
    $region25: #{tpu_custom_call.1} parent=1 // pred_fallthru
      _
    %75 = vsyncpa [#allocation3], 1
    %76 = vsyncpa [#allocation6], 1
    %77 = vsyncpa [#allocation4], 1

</llo_original>
